<compile_context>
chip_gen: v7x
topology: tpu7x:2x2x1
jax: 0.10.0
libtpu: 0.0.40
codegen_flags: <defaults>
</compile_context>

<pallas_src>
import functools

import jax
import jax.numpy as jnp
import numpy as np
from jax.experimental import pallas as pl
from jax.experimental.pallas import tpu as pltpu

# ---- small, module-consistent hyperparameters ----
VOCAB = 50          # (module default 10585*2; shrunk for the synthetic test)
EMBED_DIM = 32      # (module default 100)
NUM_FILTER = 2
FILTER_SIZES = (1, 2, 3)
OUTPUT_DIM = 5
PAD_IDX = 0
BATCH = 2
SEQ = 8

N_PAD = 128                      # lane-padded "channel" width for conv/fc outputs
MAX_FS = max(FILTER_SIZES)       # number of conv taps
TILE_B = 8                       # batch elements per grid step (sublane multiple)
SUB = 8                          # sublane quantum


def _round_up(x, m):
    return -(-x // m) * m


def cnn_kernel(emb_ref, wf_ref, bf_ref, fs_ref, wfc_ref, bfc_ref, out_ref, *,
               seq_len, seq_len_pad, tile_b, num_taps, embed_dim):
    """Per-tap conv matmuls + bias + relu + masked max-pool + fc, fused."""
    m = tile_b * seq_len_pad
    d = embed_dim
    emb = emb_ref[...]                                   # [m, D] bf16

    # Per-tap accumulated matmuls, each MXU pass at K = D (no lane-concat
    # im2col).  The tap-k shift conv[t] += emb[t+k] @ W_k is applied to the
    # f32 product with a sublane roll: roll(P_k, -k) == roll(P_k, m - k).
    conv = jnp.dot(emb, wf_ref[0:d, :], preferred_element_type=jnp.float32)
    for k in range(1, num_taps):
        p_k = jnp.dot(emb, wf_ref[k * d:(k + 1) * d, :],
                      preferred_element_type=jnp.float32)
        conv = conv + pltpu.roll(p_k, shift=m - k, axis=0)

    # Fused conv bias + ReLU (f32 elementwise).
    conv = jnp.maximum(conv + bf_ref[...], 0.0)

    # [tile_b*L_pad, 128] -> [tile_b, L_pad, 128]: pure sublane regroup
    # (L_pad is a multiple of 8).
    conv = conv.reshape(tile_b, seq_len_pad, N_PAD)

    # Structural validity mask in (batch, time, channel) coordinates.
    # INVARIANT: ReLU directly precedes this mask, so every masked position is
    # replaced by 0 <= max(valid positions); rows rolled in from other batch
    # elements / wrap-around therefore never affect the max-pool.
    t_idx = jax.lax.broadcasted_iota(jnp.int32, conv.shape, 1)
    thr = (seq_len - fs_ref[...] + 1).reshape(1, 1, N_PAD)
    conv = jnp.where(t_idx < thr, conv, 0.0)

    # Max-pool over time, per batch element.
    pooled = jnp.max(conv, axis=1)                       # [tile_b, 128] f32

    # Dropout: inference-mode identity.  Lane-padded FC (bf16 MXU, f32 acc),
    # full (8,128) tile store.
    out_ref[...] = (jnp.dot(pooled.astype(wfc_ref.dtype), wfc_ref[...],
                            preferred_element_type=jnp.float32) + bfc_ref[...])


def pack_params(params):
    """Pack conv/FC params into lane-padded fused operands ONCE (model load).

    Done in numpy so no .at[].set() scatter chain re-executes per forward.
    """
    emb_table, (w1, b1), (w2, b2), (w3, b3), wfc, bfc = params
    D = emb_table.shape[1]
    convs = ((1, w1, b1), (2, w2, b2), (3, w3, b3))

    w_fused = np.zeros((MAX_FS * D, N_PAD), np.float32)
    b_fused = np.zeros((1, N_PAD), np.float32)
    fs_lane = np.full((1, N_PAD), 10**6, np.int32)   # unused lanes: never valid
    for i, (fs, w, b) in enumerate(convs):           # w: [fs, D, NF], b: [1, NF]
        c0 = i * NUM_FILTER
        for k in range(fs):
            w_fused[k * D:(k + 1) * D, c0:c0 + NUM_FILTER] = np.asarray(w[k])
        b_fused[0, c0:c0 + NUM_FILTER] = np.asarray(b[0])
        fs_lane[0, c0:c0 + NUM_FILTER] = fs

    wfc_pad = np.zeros((N_PAD, N_PAD), np.float32)
    wfc_pad[:len(FILTER_SIZES) * NUM_FILTER, :OUTPUT_DIM] = np.asarray(wfc)
    bfc_pad = np.zeros((1, N_PAD), np.float32)
    bfc_pad[0, :OUTPUT_DIM] = np.asarray(bfc[0])

    return dict(
        emb_table=jnp.asarray(emb_table, jnp.bfloat16),   # halves gather/DMA bytes
        w_fused=jnp.asarray(w_fused, jnp.bfloat16),
        b_fused=jnp.asarray(b_fused, jnp.float32),
        fs_lane=jnp.asarray(fs_lane, jnp.int32),
        wfc_pad=jnp.asarray(wfc_pad, jnp.bfloat16),
        bfc_pad=jnp.asarray(bfc_pad, jnp.float32),
    )


def make_cnn_forward(params):
    packed = pack_params(params)   # hoisted: constant w.r.t. the input

    @jax.jit
    def forward(text):
        """text: int32 [B, L].  Returns f32 [B, OUTPUT_DIM]."""
        B, L = text.shape
        b_pad = _round_up(max(B, TILE_B), TILE_B)
        l_pad = _round_up(L, SUB)

        # Embedding gather: plain-JAX glue (padding_idx row is zero in the
        # table, so padded/pad-token rows contribute zeros).
        # TODO(synk): at real vocab/seq_len fold the gather into the kernel via
        # PrefetchScalarGridSpec(num_scalar_prefetch=1) + per-row DMA so the
        # [B*L, D] slab never round-trips through HBM.
        emb = jnp.take(packed["emb_table"], text, axis=0)          # [B, L, D] bf16
        emb = jnp.pad(emb, ((0, b_pad - B), (0, l_pad - L), (0, 0)))
        emb2d = emb.reshape(b_pad * l_pad, EMBED_DIM)

        rows = TILE_B * l_pad
        kernel = functools.partial(
            cnn_kernel, seq_len=L, seq_len_pad=l_pad, tile_b=TILE_B,
            num_taps=MAX_FS, embed_dim=EMBED_DIM)

        out_pad = pl.pallas_call(
            kernel,
            out_shape=jax.ShapeDtypeStruct((b_pad, N_PAD), jnp.float32),
            grid=(b_pad // TILE_B,),
            in_specs=[
                pl.BlockSpec((rows, EMBED_DIM), lambda i: (i, 0)),          # emb
                pl.BlockSpec((MAX_FS * EMBED_DIM, N_PAD), lambda i: (0, 0)),  # w_fused
                pl.BlockSpec((1, N_PAD), lambda i: (0, 0)),                 # b_fused
                pl.BlockSpec((1, N_PAD), lambda i: (0, 0)),                 # fs_lane
                pl.BlockSpec((N_PAD, N_PAD), lambda i: (0, 0)),             # wfc
                pl.BlockSpec((1, N_PAD), lambda i: (0, 0)),                 # bfc
            ],
            out_specs=pl.BlockSpec((TILE_B, N_PAD), lambda i: (i, 0)),
            compiler_params=pltpu.CompilerParams(
                dimension_semantics=("parallel",)),
        )(emb2d, packed["w_fused"], packed["b_fused"], packed["fs_lane"],
          packed["wfc_pad"], packed["bfc_pad"])

        return out_pad[:B, :OUTPUT_DIM]

    return forward


def init_params(key):
    keys = jax.random.split(key, 9)
    emb = jax.random.normal(keys[0], (VOCAB, EMBED_DIM), jnp.float32) * 0.1
    emb = emb.at[PAD_IDX].set(0.0)  # padding_idx row is zero

    convs = []
    for i, fs in enumerate(FILTER_SIZES):
        # PyTorch Conv2d weight [NF, 1, fs, D] -> stored as [fs, D, NF]
        w = jax.random.normal(keys[1 + 2 * i], (fs, EMBED_DIM, NUM_FILTER),
                              jnp.float32) * 0.1
        b = jax.random.normal(keys[2 + 2 * i], (1, NUM_FILTER), jnp.float32) * 0.1
        convs.append((w, b))

    wfc = jax.random.normal(keys[7], (len(FILTER_SIZES) * NUM_FILTER, OUTPUT_DIM),
                            jnp.float32) * 0.1
    bfc = jax.random.normal(keys[8], (1, OUTPUT_DIM), jnp.float32) * 0.1
    return (emb, convs[0], convs[1], convs[2], wfc, bfc)


def cnn_reference(text, params):
    """Pure-JAX f32 reference mirroring the PyTorch forward (dropout in eval mode)."""
    emb_table, (w1, b1), (w2, b2), (w3, b3), wfc, bfc = params
    embedded = jnp.take(emb_table, text, axis=0)   # [B, L, D]
    pooled = []
    for fs, w, b in ((1, w1, b1), (2, w2, b2), (3, w3, b3)):
        L = embedded.shape[1]
        l_out = L - fs + 1
        acc = sum(jnp.einsum("bld,dn->bln", embedded[:, k:k + l_out, :], w[k])
                  for k in range(fs)) + b[None]
        acc = jnp.maximum(acc, 0.0)
        pooled.append(jnp.max(acc, axis=1))        # [B, NF]
    cat = jnp.concatenate(pooled, axis=1)          # [B, 3*NF]
    return cat @ wfc + bfc


if __name__ == "__main__":
    key = jax.random.PRNGKey(0)
    pkey, tkey = jax.random.split(key)
    params = init_params(pkey)
    forward = make_cnn_forward(params)

    text = jax.random.randint(tkey, (BATCH, SEQ), 0, VOCAB, dtype=jnp.int32)

    out = jax.block_until_ready(forward(text))
    ref = jax.block_until_ready(cnn_reference(text, params))

    # bf16 MXU operands introduce ~1e-3 absolute error at these magnitudes.
    np.testing.assert_allclose(np.asarray(out), np.asarray(ref),
                               atol=5e-3, rtol=1e-2)

    print("KERNEL_OK")
</pallas_src>

<mosaic_0001>
module attributes {stable_mosaic.version = 11 : i64} {
  func.func @cnn_kernel(%arg0: i32, %arg1: memref<64x32xbf16, #tpu.memory_space<vmem>>, %arg2: memref<96x128xbf16, #tpu.memory_space<vmem>>, %arg3: memref<1x128xf32, #tpu.memory_space<vmem>>, %arg4: memref<1x128xi32, #tpu.memory_space<vmem>>, %arg5: memref<128x128xbf16, #tpu.memory_space<vmem>>, %arg6: memref<1x128xf32, #tpu.memory_space<vmem>>, %arg7: memref<8x128xf32, #tpu.memory_space<vmem>>) attributes {dimension_semantics = [#tpu.dimension_semantics<parallel>], iteration_bounds = array<i64: 1>, scalar_prefetch = 0 : i64, scratch_operands = 0 : i64, tpu.core_type = #tpu.core_type<tc>, window_params = [{transform_indices = @transform_0, window_bounds = array<i64: 64, 32>}, {pipeline_mode = #tpu.pipeline_mode<synchronous>, transform_indices = @transform_1, window_bounds = array<i64: 96, 128>}, {pipeline_mode = #tpu.pipeline_mode<synchronous>, transform_indices = @transform_2, window_bounds = array<i64: 1, 128>}, {pipeline_mode = #tpu.pipeline_mode<synchronous>, transform_indices = @transform_3, window_bounds = array<i64: 1, 128>}, {pipeline_mode = #tpu.pipeline_mode<synchronous>, transform_indices = @transform_4, window_bounds = array<i64: 128, 128>}, {pipeline_mode = #tpu.pipeline_mode<synchronous>, transform_indices = @transform_5, window_bounds = array<i64: 1, 128>}, {transform_indices = @transform_6, window_bounds = array<i64: 8, 128>}]} {
    %c0 = arith.constant 0 : index
    %c0_0 = arith.constant 0 : index
    %0 = vector.load %arg1[%c0, %c0_0] : memref<64x32xbf16, #tpu.memory_space<vmem>>, vector<64x32xbf16>
    %c0_1 = arith.constant 0 : index
    %c0_2 = arith.constant 0 : index
    %1 = vector.load %arg2[%c0_1, %c0_2] : memref<96x128xbf16, #tpu.memory_space<vmem>>, vector<32x128xbf16>
    %cst = arith.constant dense<0.000000e+00> : vector<64x128xf32>
    %2 = tpu.matmul %0, %1, %cst {dimension_numbers = #tpu.dot_dimension_numbers<[1], [0], [0], [1], [0, 0, 1, 1], [], []>} : vector<64x32xbf16>, vector<32x128xbf16>, vector<64x128xf32> -> vector<64x128xf32>
    %c32 = arith.constant 32 : index
    %c0_3 = arith.constant 0 : index
    %3 = vector.load %arg2[%c32, %c0_3] : memref<96x128xbf16, #tpu.memory_space<vmem>>, vector<32x128xbf16>
    %cst_4 = arith.constant dense<0.000000e+00> : vector<64x128xf32>
    %4 = tpu.matmul %0, %3, %cst_4 {dimension_numbers = #tpu.dot_dimension_numbers<[1], [0], [0], [1], [0, 0, 1, 1], [], []>} : vector<64x32xbf16>, vector<32x128xbf16>, vector<64x128xf32> -> vector<64x128xf32>
    %c63_i32 = arith.constant 63 : i32
    %5 = tpu.dynamic_rotate %4 by %c63_i32 dim 0 : vector<64x128xf32>, i32 -> vector<64x128xf32>
    %6 = arith.addf %2, %5 : vector<64x128xf32>
    %c64 = arith.constant 64 : index
    %c0_5 = arith.constant 0 : index
    %7 = vector.load %arg2[%c64, %c0_5] : memref<96x128xbf16, #tpu.memory_space<vmem>>, vector<32x128xbf16>
    %cst_6 = arith.constant dense<0.000000e+00> : vector<64x128xf32>
    %8 = tpu.matmul %0, %7, %cst_6 {dimension_numbers = #tpu.dot_dimension_numbers<[1], [0], [0], [1], [0, 0, 1, 1], [], []>} : vector<64x32xbf16>, vector<32x128xbf16>, vector<64x128xf32> -> vector<64x128xf32>
    %c62_i32 = arith.constant 62 : i32
    %9 = tpu.dynamic_rotate %8 by %c62_i32 dim 0 : vector<64x128xf32>, i32 -> vector<64x128xf32>
    %10 = arith.addf %6, %9 : vector<64x128xf32>
    %c0_7 = arith.constant 0 : index
    %c0_8 = arith.constant 0 : index
    %11 = vector.load %arg3[%c0_7, %c0_8] : memref<1x128xf32, #tpu.memory_space<vmem>>, vector<1x128xf32>
    %12 = vector.broadcast %11 : vector<1x128xf32> to vector<64x128xf32>
    %13 = arith.addf %10, %12 : vector<64x128xf32>
    %cst_9 = arith.constant 0.000000e+00 : f32
    %14 = vector.broadcast %cst_9 : f32 to vector<64x128xf32>
    %15 = arith.maximumf %13, %14 : vector<64x128xf32>
    %16 = vector.shape_cast %15 : vector<64x128xf32> to vector<8x8x128xf32>
    %17 = tpu.iota {dimensions = array<i32: 1>} : vector<8x8x128xi32>
    %c0_10 = arith.constant 0 : index
    %c0_11 = arith.constant 0 : index
    %18 = vector.load %arg4[%c0_10, %c0_11] : memref<1x128xi32, #tpu.memory_space<vmem>>, vector<1x128xi32>
    %c8_i32 = arith.constant 8 : i32
    %19 = vector.broadcast %c8_i32 : i32 to vector<1x128xi32>
    %20 = arith.subi %19, %18 : vector<1x128xi32>
    %c1_i32 = arith.constant 1 : i32
    %21 = vector.broadcast %c1_i32 : i32 to vector<1x128xi32>
    %22 = arith.addi %20, %21 : vector<1x128xi32>
    %23 = vector.shape_cast %22 : vector<1x128xi32> to vector<1x1x128xi32>
    %24 = vector.broadcast %23 : vector<1x1x128xi32> to vector<8x8x128xi32>
    %25 = arith.cmpi slt, %17, %24 : vector<8x8x128xi32>
    %cst_12 = arith.constant 0.000000e+00 : f32
    %26 = vector.broadcast %cst_12 : f32 to vector<8x8x128xf32>
    %27 = arith.select %25, %16, %26 : vector<8x8x128xi1>, vector<8x8x128xf32>
    %cst_13 = arith.constant dense<0xFF800000> : vector<8x128xf32>
    %28 = vector.multi_reduction <maximumf>, %27, %cst_13 [1] : vector<8x8x128xf32> to vector<8x128xf32>
    %29 = arith.truncf %28 : vector<8x128xf32> to vector<8x128xbf16>
    %c0_14 = arith.constant 0 : index
    %c0_15 = arith.constant 0 : index
    %30 = vector.load %arg5[%c0_14, %c0_15] : memref<128x128xbf16, #tpu.memory_space<vmem>>, vector<128x128xbf16>
    %cst_16 = arith.constant dense<0.000000e+00> : vector<8x128xf32>
    %31 = tpu.matmul %29, %30, %cst_16 {dimension_numbers = #tpu.dot_dimension_numbers<[1], [0], [0], [1], [0, 0, 1, 1], [], []>} : vector<8x128xbf16>, vector<128x128xbf16>, vector<8x128xf32> -> vector<8x128xf32>
    %c0_17 = arith.constant 0 : index
    %c0_18 = arith.constant 0 : index
    %32 = vector.load %arg6[%c0_17, %c0_18] : memref<1x128xf32, #tpu.memory_space<vmem>>, vector<1x128xf32>
    %33 = vector.broadcast %32 : vector<1x128xf32> to vector<8x128xf32>
    %34 = arith.addf %31, %33 : vector<8x128xf32>
    %c0_19 = arith.constant 0 : index
    %c0_20 = arith.constant 0 : index
    %35 = vector.load %arg7[%c0_19, %c0_20] : memref<8x128xf32, #tpu.memory_space<vmem>>, vector<8x128xf32>
    tpu.vector_store %arg7[%c0_19, %c0_20], %34 {strides = array<i32>} : memref<8x128xf32, #tpu.memory_space<vmem>>, vector<8x128xf32>,
    return
  }
  func.func @transform_0(%arg0: i32) -> (i32, i32) {
    %c0_i32 = arith.constant 0 : i32
    %c0_i32_0 = arith.constant 0 : i32
    return %arg0, %c0_i32 : i32, i32
  }
  func.func @transform_1(%arg0: i32) -> (i32, i32) {
    %c0_i32 = arith.constant 0 : i32
    %c0_i32_0 = arith.constant 0 : i32
    %c0_i32_1 = arith.constant 0 : i32
    return %c0_i32, %c0_i32_0 : i32, i32
  }
  func.func @transform_2(%arg0: i32) -> (i32, i32) {
    %c0_i32 = arith.constant 0 : i32
    %c0_i32_0 = arith.constant 0 : i32
    %c0_i32_1 = arith.constant 0 : i32
    return %c0_i32, %c0_i32_0 : i32, i32
  }
  func.func @transform_3(%arg0: i32) -> (i32, i32) {
    %c0_i32 = arith.constant 0 : i32
    %c0_i32_0 = arith.constant 0 : i32
    %c0_i32_1 = arith.constant 0 : i32
    return %c0_i32, %c0_i32_0 : i32, i32
  }
  func.func @transform_4(%arg0: i32) -> (i32, i32) {
    %c0_i32 = arith.constant 0 : i32
    %c0_i32_0 = arith.constant 0 : i32
    %c0_i32_1 = arith.constant 0 : i32
    return %c0_i32, %c0_i32_0 : i32, i32
  }
  func.func @transform_5(%arg0: i32) -> (i32, i32) {
    %c0_i32 = arith.constant 0 : i32
    %c0_i32_0 = arith.constant 0 : i32
    %c0_i32_1 = arith.constant 0 : i32
    return %c0_i32, %c0_i32_0 : i32, i32
  }
  func.func @transform_6(%arg0: i32) -> (i32, i32) {
    %c0_i32 = arith.constant 0 : i32
    %c0_i32_0 = arith.constant 0 : i32
    return %arg0, %c0_i32 : i32, i32
  }
}

</mosaic_0001>

<llo_original>
// kernel: forward.1
$region0: #{forward.1}
  #allocation0 [shape = 'u32[]', space=smem, size = 0x4, offset = 0x4, fixed_abs, tag = 'smem constant byte address 0x4 - core index']
  #allocation1 [shape = 'u32[144,128]{1,0:T(1,128)}', space=vmem, size = 0x12000, scoped, tag = 'internal scratch']
  %s0 = inlined_call_operand.vmem [shape: bf16[64,32], index: 0, kind: input, shape index: {}]
  %s1 = inlined_call_operand.vmem [shape: bf16[96,128], index: 1, kind: input, shape index: {}]
  %s2 = inlined_call_operand.vmem [shape: f32[1,128], index: 2, kind: input, shape index: {}]
  %s3 = inlined_call_operand.vmem [shape: s32[1,128], index: 3, kind: input, shape index: {}]
  %s4 = inlined_call_operand.vmem [shape: bf16[128,128], index: 4, kind: input, shape index: {}]
  %s5 = inlined_call_operand.vmem [shape: f32[1,128], index: 5, kind: input, shape index: {}]
  %s6 = inlined_call_operand.vmem [shape: f32[8,128], index: 6, kind: output, shape index: {}]
  %s7 = sld [smem:[#allocation0]]
  $region34: #{forward.1} parent=0
    _
  %s9 = ssub.s32 1, %s7
  %s10 = scalar_select 0, %s9, %s7
  // Predicated region
  $region2: #{forward.1} parent=0 // pred_check
    _
  $region3: #{forward.1} parent=0 // pred_check_branch
    %12 = sbr.rel (0) target = $region5
  $region4: #{forward.1} parent=0 // pred_region
    _
  $region5: #{forward.1} parent=0 // pred_fallthru
    _
  // Predicated region
  $region6: #{forward.1} parent=0 // pred_check
    _
  $region7: #{forward.1} parent=0 // pred_check_branch
    %14 = sbr.rel (0) target = $region9
  $region8: #{forward.1} parent=0 // pred_region
    _
  $region9: #{forward.1} parent=0 // pred_fallthru
    _
  // Predicated region
  $region10: #{forward.1} parent=0 // pred_check
    _
  $region11: #{forward.1} parent=0 // pred_check_branch
    %16 = sbr.rel (0) target = $region13
  $region12: #{forward.1} parent=0 // pred_region
    _
  $region13: #{forward.1} parent=0 // pred_fallthru
    _
  // Predicated region
  $region14: #{forward.1} parent=0 // pred_check
    _
  $region15: #{forward.1} parent=0 // pred_check_branch
    %18 = sbr.rel (0) target = $region17
  $region16: #{forward.1} parent=0 // pred_region
    _
  $region17: #{forward.1} parent=0 // pred_fallthru
    _
  // Predicated region
  $region18: #{forward.1} parent=0 // pred_check
    _
  $region19: #{forward.1} parent=0 // pred_check_branch
    %20 = sbr.rel (0) target = $region21
  $region20: #{forward.1} parent=0 // pred_region
    _
  $region21: #{forward.1} parent=0 // pred_fallthru
    _
  // Predicated region
  $region22: #{forward.1} parent=0 // pred_check
    _
  $region23: #{forward.1} parent=0 // pred_check_branch
    %22 = sbr.rel (0) target = $region25
  $region24: #{forward.1} parent=0 // pred_region
    _
  $region25: #{forward.1} parent=0 // pred_fallthru
    _
  %v24 = vld [vmem:[%s0] sm:$0xf]
  %v25 = vld [vmem:[%s0 + $0x4] sm:$0xf]
  %v26 = vld [vmem:[%s0 + $0x8] sm:$0xf]
  %v27 = vld [vmem:[%s0 + $0xc] sm:$0xf]
  %v28 = vld [vmem:[%s0 + $0x10] sm:$0xf]
  %v29 = vld [vmem:[%s0 + $0x14] sm:$0xf]
  %v30 = vld [vmem:[%s0 + $0x18] sm:$0xf]
  %v31 = vld [vmem:[%s0 + $0x1c] sm:$0xf]
  %v32 = vld [vmem:[%s1] sm:$0xf]
  %v33 = vld [vmem:[%s1 + $0x4] sm:$0xf]
  %v34 = vld [vmem:[%s1 + $0x8] sm:$0xf]
  %v35 = vld [vmem:[%s1 + $0xc] sm:$0xf]
  %v36 = vld [vmem:[%s1 + $0x10] sm:$0xf]
  %v37 = vld [vmem:[%s1 + $0x14] sm:$0xf]
  %v38 = vld [vmem:[%s1 + $0x18] sm:$0xf]
  %v39 = vld [vmem:[%s1 + $0x1c] sm:$0xf]
  %v48 = vunpack.c.l.b16 %v24
  %v49 = vunpack.c.l.b16 %v25
  %v50 = vunpack.c.l.b16 %v26
  %v51 = vunpack.c.l.b16 %v27
  %v52 = vunpack.c.l.b16 %v28
  %v53 = vunpack.c.l.b16 %v29
  %v54 = vunpack.c.l.b16 %v30
  %v55 = vunpack.c.l.b16 %v31
  %v56 = vpack.c.b16 %v49, %v48
  %v57 = vpack.c.b16 %v51, %v50
  %v58 = vpack.c.b16 %v53, %v52
  %v59 = vpack.c.b16 %v55, %v54
  %v64 = vunpack.c.l.b16 %v36
  %v65 = vunpack.c.l.b16 %v37
  %v66 = vunpack.c.l.b16 %v38
  %v67 = vunpack.c.l.b16 %v39
  %v68 = vpack.c.b16 %v65, %v64
  %v69 = vpack.c.b16 %v67, %v66
  %vm72 = vcmask 261120
  %v74 = vsel %vm72, %v56, 0
  %v77 = vsel %vm72, %v57, 0
  %v80 = vsel %vm72, %v58, 0
  %v83 = vsel %vm72, %v59, 0
  %85 = vmatprep.subr.bf16.mxu0 0
  %86 = vmatpush1.bf16.msra.mxu0 %v68
  %87 = vmatprep.subr.bf16.mxu0 0
  %88 = vmatpush1.bf16.msra.mxu0 %v69
  %89 = vmatprep.subr.bf16.mxu0 0
  %90 = vmatpush1.bf16.msra.mxu0 0
  %91 = vmatprep.subr.bf16.mxu0 0
  %92 = vmatpush1.bf16.msra.mxu0 0
  %93 = vmatprep.subr.bf16.mxu0 0
  %94 = vmatpush1.bf16.msra.mxu0 0
  %95 = vmatprep.subr.bf16.mxu0 0
  %96 = vmatpush1.bf16.msra.mxu0 0
  %97 = vmatprep.subr.bf16.mxu0 0
  %98 = vmatpush1.bf16.msra.mxu0 0
  %99 = vmatprep.subr.bf16.mxu0 0
  %100 = vmatpush1.bf16.msra.mxu0 0
  %101 = vmatprep.subr.bf16.mxu0 0
  %102 = vmatpush1.bf16.msra.mxu0 0
  %103 = vmatprep.subr.bf16.mxu0 0
  %104 = vmatpush1.bf16.msra.mxu0 0
  %105 = vmatprep.subr.bf16.mxu0 0
  %106 = vmatpush1.bf16.msra.mxu0 0
  %107 = vmatprep.subr.bf16.mxu0 0
  %108 = vmatpush1.bf16.msra.mxu0 0
  %109 = vmatprep.subr.bf16.mxu0 0
  %110 = vmatpush1.bf16.msra.mxu0 0
  %111 = vmatprep.subr.bf16.mxu0 0
  %112 = vmatpush1.bf16.msra.mxu0 0
  %113 = vmatprep.subr.bf16.mxu0 0
  %114 = vmatpush1.bf16.msra.mxu0 0
  %115 = vmatprep.subr.bf16.mxu0 0
  %116 = vmatpush1.bf16.msra.mxu0 0
  %117 = vmatprep.mubr.bf16.mxu0 0
  %118 = vmatmul.mubr.bf16.gmra.mrb[0].mxu0 %v74
  %v119 = vpop.f32.mrb[0].mxu0
  %v120 = vadd.f32 0.0, %v119
  %v121 = vpop.f32.mrb[0].mxu0
  %v122 = vpop.f32.mrb[0].mxu0
  %v123 = vadd.f32 0.0, %v122
  %v124 = vpop.f32.mrb[0].mxu0
  %125 = vmatprep.mubr.bf16.mxu0 0
  %126 = vmatmul.mubr.bf16.gmra.mrb[0].mxu0 %v77
  %v127 = vpop.f32.mrb[0].mxu0
  %v128 = vadd.f32 0.0, %v127
  %v129 = vpop.f32.mrb[0].mxu0
  %v130 = vpop.f32.mrb[0].mxu0
  %v131 = vadd.f32 0.0, %v130
  %v132 = vpop.f32.mrb[0].mxu0
  %133 = vmatprep.mubr.bf16.mxu0 0
  %134 = vmatmul.mubr.bf16.gmra.mrb[0].mxu0 %v80
  %v135 = vpop.f32.mrb[0].mxu0
  %v136 = vadd.f32 0.0, %v135
  %v137 = vpop.f32.mrb[0].mxu0
  %v138 = vpop.f32.mrb[0].mxu0
  %v139 = vadd.f32 0.0, %v138
  %v140 = vpop.f32.mrb[0].mxu0
  %141 = vmatprep.mubr.bf16.mxu0 0
  %142 = vmatmul.mubr.bf16.gmra.mrb[0].mxu0 %v83
  %v143 = vpop.f32.mrb[0].mxu0
  %v144 = vadd.f32 0.0, %v143
  %v145 = vpop.f32.mrb[0].mxu0
  %v146 = vpop.f32.mrb[0].mxu0
  %v147 = vadd.f32 0.0, %v146
  %v148 = vpop.f32.mrb[0].mxu0
  %149 = vdwg.mxu0
  %v150 = vrot.slane %v120, 1
  %v151 = vrot.slane %v123, 1
  %v152 = vrot.slane %v128, 1
  %v153 = vrot.slane %v131, 1
  %v154 = vrot.slane %v136, 1
  %v155 = vrot.slane %v139, 1
  %v156 = vrot.slane %v144, 1
  %v157 = vrot.slane %v147, 1
  %v158 = vlaneseq
  %v159 = vshrl.u32 %v158, 7
  %vm160 = vcmp.lt.s32.totalorder %v159, 7
  %v161 = vsel %vm160, %v156, %v157
  %v162 = vsel %vm160, %v155, %v156
  %v163 = vsel %vm160, %v154, %v155
  %v164 = vsel %vm160, %v153, %v154
  %v165 = vsel %vm160, %v152, %v153
  %v166 = vsel %vm160, %v151, %v152
  %v167 = vsel %vm160, %v150, %v151
  %v168 = vsel %vm160, %v157, %v150
  %v173 = vunpack.c.l.b16 %v32
  %v174 = vunpack.c.l.b16 %v33
  %v175 = vunpack.c.l.b16 %v34
  %v176 = vunpack.c.l.b16 %v35
  %v177 = vpack.c.b16 %v174, %v173
  %v178 = vpack.c.b16 %v176, %v175
  %181 = vmatprep.subr.bf16.mxu0 0
  %182 = vmatpush1.bf16.msra.mxu0 %v177
  %183 = vmatprep.subr.bf16.mxu0 0
  %184 = vmatpush1.bf16.msra.mxu0 %v178
  %185 = vmatprep.subr.bf16.mxu0 0
  %186 = vmatpush1.bf16.msra.mxu0 0
  %187 = vmatprep.subr.bf16.mxu0 0
  %188 = vmatpush1.bf16.msra.mxu0 0
  %189 = vmatprep.subr.bf16.mxu0 0
  %190 = vmatpush1.bf16.msra.mxu0 0
  %191 = vmatprep.subr.bf16.mxu0 0
  %192 = vmatpush1.bf16.msra.mxu0 0
  %193 = vmatprep.subr.bf16.mxu0 0
  %194 = vmatpush1.bf16.msra.mxu0 0
  %195 = vmatprep.subr.bf16.mxu0 0
  %196 = vmatpush1.bf16.msra.mxu0 0
  %197 = vmatprep.subr.bf16.mxu0 0
  %198 = vmatpush1.bf16.msra.mxu0 0
  %199 = vmatprep.subr.bf16.mxu0 0
  %200 = vmatpush1.bf16.msra.mxu0 0
  %201 = vmatprep.subr.bf16.mxu0 0
  %202 = vmatpush1.bf16.msra.mxu0 0
  %203 = vmatprep.subr.bf16.mxu0 0
  %204 = vmatpush1.bf16.msra.mxu0 0
  %205 = vmatprep.subr.bf16.mxu0 0
  %206 = vmatpush1.bf16.msra.mxu0 0
  %207 = vmatprep.subr.bf16.mxu0 0
  %208 = vmatpush1.bf16.msra.mxu0 0
  %209 = vmatprep.subr.bf16.mxu0 0
  %210 = vmatpush1.bf16.msra.mxu0 0
  %211 = vmatprep.subr.bf16.mxu0 0
  %212 = vmatpush1.bf16.msra.mxu0 0
  %213 = vmatprep.mubr.bf16.mxu0 0
  %214 = vmatmul.mubr.bf16.gmra.mrb[0].mxu0 %v74
  %v215 = vpop.f32.mrb[0].mxu0
  %v216 = vadd.f32 %v167, %v215
  %v217 = vpop.f32.mrb[0].mxu0
  %v218 = vpop.f32.mrb[0].mxu0
  %v219 = vadd.f32 %v166, %v218
  %v220 = vpop.f32.mrb[0].mxu0
  %221 = vmatprep.mubr.bf16.mxu0 0
  %222 = vmatmul.mubr.bf16.gmra.mrb[0].mxu0 %v77
  %v223 = vpop.f32.mrb[0].mxu0
  %v224 = vadd.f32 %v165, %v223
  %v225 = vpop.f32.mrb[0].mxu0
  %v226 = vpop.f32.mrb[0].mxu0
  %v227 = vadd.f32 %v164, %v226
  %v228 = vpop.f32.mrb[0].mxu0
  %229 = vmatprep.mubr.bf16.mxu0 0
  %230 = vmatmul.mubr.bf16.gmra.mrb[0].mxu0 %v80
  %v231 = vpop.f32.mrb[0].mxu0
  %v232 = vadd.f32 %v163, %v231
  %v233 = vpop.f32.mrb[0].mxu0
  %v234 = vpop.f32.mrb[0].mxu0
  %v235 = vadd.f32 %v162, %v234
  %v236 = vpop.f32.mrb[0].mxu0
  %237 = vmatprep.mubr.bf16.mxu0 0
  %238 = vmatmul.mubr.bf16.gmra.mrb[0].mxu0 %v83
  %v239 = vpop.f32.mrb[0].mxu0
  %v240 = vadd.f32 %v161, %v239
  %v241 = vpop.f32.mrb[0].mxu0
  %v242 = vpop.f32.mrb[0].mxu0
  %v243 = vadd.f32 %v168, %v242
  %v244 = vpop.f32.mrb[0].mxu0
  %245 = vdwg.mxu0
  %v246 = vld [vmem:[%s1 + $0x20] sm:$0xf]
  %v247 = vld [vmem:[%s1 + $0x24] sm:$0xf]
  %v248 = vld [vmem:[%s1 + $0x28] sm:$0xf]
  %v249 = vld [vmem:[%s1 + $0x2c] sm:$0xf]
  %v254 = vunpack.c.l.b16 %v246
  %v255 = vunpack.c.l.b16 %v247
  %v256 = vunpack.c.l.b16 %v248
  %v257 = vunpack.c.l.b16 %v249
  %v258 = vpack.c.b16 %v255, %v254
  %v259 = vpack.c.b16 %v257, %v256
  %262 = vmatprep.subr.bf16.mxu0 0
  %263 = vmatpush1.bf16.msra.mxu0 %v258
  %264 = vmatprep.subr.bf16.mxu0 0
  %265 = vmatpush1.bf16.msra.mxu0 %v259
  %266 = vmatprep.subr.bf16.mxu0 0
  %267 = vmatpush1.bf16.msra.mxu0 0
  %268 = vmatprep.subr.bf16.mxu0 0
  %269 = vmatpush1.bf16.msra.mxu0 0
  %270 = vmatprep.subr.bf16.mxu0 0
  %271 = vmatpush1.bf16.msra.mxu0 0
  %272 = vmatprep.subr.bf16.mxu0 0
  %273 = vmatpush1.bf16.msra.mxu0 0
  %274 = vmatprep.subr.bf16.mxu0 0
  %275 = vmatpush1.bf16.msra.mxu0 0
  %276 = vmatprep.subr.bf16.mxu0 0
  %277 = vmatpush1.bf16.msra.mxu0 0
  %278 = vmatprep.subr.bf16.mxu0 0
  %279 = vmatpush1.bf16.msra.mxu0 0
  %280 = vmatprep.subr.bf16.mxu0 0
  %281 = vmatpush1.bf16.msra.mxu0 0
  %282 = vmatprep.subr.bf16.mxu0 0
  %283 = vmatpush1.bf16.msra.mxu0 0
  %284 = vmatprep.subr.bf16.mxu0 0
  %285 = vmatpush1.bf16.msra.mxu0 0
  %286 = vmatprep.subr.bf16.mxu0 0
  %287 = vmatpush1.bf16.msra.mxu0 0
  %288 = vmatprep.subr.bf16.mxu0 0
  %289 = vmatpush1.bf16.msra.mxu0 0
  %290 = vmatprep.subr.bf16.mxu0 0
  %291 = vmatpush1.bf16.msra.mxu0 0
  %292 = vmatprep.subr.bf16.mxu0 0
  %293 = vmatpush1.bf16.msra.mxu0 0
  %294 = vmatprep.mubr.bf16.mxu0 0
  %295 = vmatmul.mubr.bf16.gmra.mrb[0].mxu0 %v74
  %v296 = vpop.f32.mrb[0].mxu0
  %v297 = vadd.f32 0.0, %v296
  %v298 = vpop.f32.mrb[0].mxu0
  %v299 = vpop.f32.mrb[0].mxu0
  %v300 = vadd.f32 0.0, %v299
  %v301 = vpop.f32.mrb[0].mxu0
  %302 = vmatprep.mubr.bf16.mxu0 0
  %303 = vmatmul.mubr.bf16.gmra.mrb[0].mxu0 %v77
  %v304 = vpop.f32.mrb[0].mxu0
  %v305 = vadd.f32 0.0, %v304
  %v306 = vpop.f32.mrb[0].mxu0
  %v307 = vpop.f32.mrb[0].mxu0
  %v308 = vadd.f32 0.0, %v307
  %v309 = vpop.f32.mrb[0].mxu0
  %310 = vmatprep.mubr.bf16.mxu0 0
  %311 = vmatmul.mubr.bf16.gmra.mrb[0].mxu0 %v80
  %v312 = vpop.f32.mrb[0].mxu0
  %v313 = vadd.f32 0.0, %v312
  %v314 = vpop.f32.mrb[0].mxu0
  %v315 = vpop.f32.mrb[0].mxu0
  %v316 = vadd.f32 0.0, %v315
  %v317 = vpop.f32.mrb[0].mxu0
  %318 = vmatprep.mubr.bf16.mxu0 0
  %319 = vmatmul.mubr.bf16.gmra.mrb[0].mxu0 %v83
  %v320 = vpop.f32.mrb[0].mxu0
  %v321 = vadd.f32 0.0, %v320
  %v322 = vpop.f32.mrb[0].mxu0
  %v323 = vpop.f32.mrb[0].mxu0
  %v324 = vadd.f32 0.0, %v323
  %v325 = vpop.f32.mrb[0].mxu0
  %326 = vdwg.mxu0
  %v327 = vrot.slane %v297, 2
  %v328 = vrot.slane %v300, 2
  %v329 = vrot.slane %v305, 2
  %v330 = vrot.slane %v308, 2
  %v331 = vrot.slane %v313, 2
  %v332 = vrot.slane %v316, 2
  %v333 = vrot.slane %v321, 2
  %v334 = vrot.slane %v324, 2
  %vm335 = vcmp.lt.s32.totalorder %v159, 6
  %v336 = vsel %vm335, %v333, %v334
  %v337 = vsel %vm335, %v332, %v333
  %v338 = vsel %vm335, %v331, %v332
  %v339 = vsel %vm335, %v330, %v331
  %v340 = vsel %vm335, %v329, %v330
  %v341 = vsel %vm335, %v328, %v329
  %v342 = vsel %vm335, %v327, %v328
  %v343 = vsel %vm335, %v334, %v327
  %v344 = vadd.f32 %v216, %v342
  %v345 = vadd.f32 %v219, %v341
  %v346 = vadd.f32 %v224, %v340
  %v347 = vadd.f32 %v227, %v339
  %v348 = vadd.f32 %v232, %v338
  %v349 = vadd.f32 %v235, %v337
  %v350 = vadd.f32 %v240, %v336
  %v351 = vadd.f32 %v243, %v343
  %v352 = vld [vmem:[%s2] sm:$0x1]
  %v354 = vlaneseq
  %v355 = vshrl.u32 %v354, 7
  %v356 = vsub.s32 0, %v355
  %v357 = vrot.slane %v352, %v356
  %v359 = vadd.f32 %v344, %v357
  %v360 = vadd.f32 %v345, %v357
  %v361 = vadd.f32 %v346, %v357
  %v362 = vadd.f32 %v347, %v357
  %v363 = vadd.f32 %v348, %v357
  %v364 = vadd.f32 %v349, %v357
  %v365 = vadd.f32 %v350, %v357
  %v366 = vadd.f32 %v351, %v357
  %v367 = vmax.f32 %v359, 0.0
  %v368 = vmax.f32 %v360, 0.0
  %v369 = vmax.f32 %v361, 0.0
  %v370 = vmax.f32 %v362, 0.0
  %v371 = vmax.f32 %v363, 0.0
  %v372 = vmax.f32 %v364, 0.0
  %v373 = vmax.f32 %v365, 0.0
  %v374 = vmax.f32 %v366, 0.0
  %v375 = vld [vmem:[%s3] sm:$0x1]
  %v376 = vsub.s32 8, %v375
  %v377 = vadd.s32 %v376, 1
  %v378 = vlaneseq
  %v379 = vshrl.u32 %v378, 7
  %v380 = vsub.s32 0, %v379
  %v381 = vrot.slane %v377, %v380
  %vm382 = vcmp.lt.s32.totalorder %v159, %v381
  %v383 = vsel %vm382, %v367, 0.0
  %v384 = vsel %vm382, %v368, 0.0
  %v385 = vsel %vm382, %v369, 0.0
  %v386 = vsel %vm382, %v370, 0.0
  %v387 = vsel %vm382, %v371, 0.0
  %v388 = vsel %vm382, %v372, 0.0
  %v389 = vsel %vm382, %v373, 0.0
  %v390 = vsel %vm382, %v374, 0.0
  %v391 = vrot.slane %v383, 4
  %v392 = vmax.f32 %v383, %v391
  %v393 = vrot.slane %v392, 2
  %v394 = vmax.f32 %v392, %v393
  %v395 = vrot.slane %v394, 1
  %v396 = vmax.f32 %v394, %v395
  %v397 = vrot.slane %v384, 4
  %v398 = vmax.f32 %v384, %v397
  %v399 = vrot.slane %v398, 2
  %v400 = vmax.f32 %v398, %v399
  %v401 = vrot.slane %v400, 1
  %v402 = vmax.f32 %v400, %v401
  %v403 = vrot.slane %v385, 4
  %v404 = vmax.f32 %v385, %v403
  %v405 = vrot.slane %v404, 2
  %v406 = vmax.f32 %v404, %v405
  %v407 = vrot.slane %v406, 1
  %v408 = vmax.f32 %v406, %v407
  %v409 = vrot.slane %v386, 4
  %v410 = vmax.f32 %v386, %v409
  %v411 = vrot.slane %v410, 2
  %v412 = vmax.f32 %v410, %v411
  %v413 = vrot.slane %v412, 1
  %v414 = vmax.f32 %v412, %v413
  %v415 = vrot.slane %v387, 4
  %v416 = vmax.f32 %v387, %v415
  %v417 = vrot.slane %v416, 2
  %v418 = vmax.f32 %v416, %v417
  %v419 = vrot.slane %v418, 1
  %v420 = vmax.f32 %v418, %v419
  %v421 = vrot.slane %v388, 4
  %v422 = vmax.f32 %v388, %v421
  %v423 = vrot.slane %v422, 2
  %v424 = vmax.f32 %v422, %v423
  %v425 = vrot.slane %v424, 1
  %v426 = vmax.f32 %v424, %v425
  %v427 = vrot.slane %v389, 4
  %v428 = vmax.f32 %v389, %v427
  %v429 = vrot.slane %v428, 2
  %v430 = vmax.f32 %v428, %v429
  %v431 = vrot.slane %v430, 1
  %v432 = vmax.f32 %v430, %v431
  %v433 = vrot.slane %v390, 4
  %v434 = vmax.f32 %v390, %v433
  %v435 = vrot.slane %v434, 2
  %v436 = vmax.f32 %v434, %v435
  %v437 = vrot.slane %v436, 1
  %v438 = vmax.f32 %v436, %v437
  %v439 = vpack.c.bf16 %v396, %v396
  %v440 = vpack.c.bf16 %v402, %v402
  %v441 = vpack.c.bf16 %v408, %v408
  %v442 = vpack.c.bf16 %v414, %v414
  %v443 = vpack.c.bf16 %v420, %v420
  %v444 = vpack.c.bf16 %v426, %v426
  %v445 = vpack.c.bf16 %v432, %v432
  %v446 = vpack.c.bf16 %v438, %v438
  %v447 = vld [vmem:[%s4] sm:$0xf]
  %v448 = vld [vmem:[%s4 + $0x4] sm:$0xf]
  %v449 = vld [vmem:[%s4 + $0x8] sm:$0xf]
  %v450 = vld [vmem:[%s4 + $0xc] sm:$0xf]
  %v451 = vld [vmem:[%s4 + $0x10] sm:$0xf]
  %v452 = vld [vmem:[%s4 + $0x14] sm:$0xf]
  %v453 = vld [vmem:[%s4 + $0x18] sm:$0xf]
  %v454 = vld [vmem:[%s4 + $0x1c] sm:$0xf]
  %v455 = vld [vmem:[%s4 + $0x20] sm:$0xf]
  %v456 = vld [vmem:[%s4 + $0x24] sm:$0xf]
  %v457 = vld [vmem:[%s4 + $0x28] sm:$0xf]
  %v458 = vld [vmem:[%s4 + $0x2c] sm:$0xf]
  %v459 = vld [vmem:[%s4 + $0x30] sm:$0xf]
  %v460 = vld [vmem:[%s4 + $0x34] sm:$0xf]
  %v461 = vld [vmem:[%s4 + $0x38] sm:$0xf]
  %v462 = vld [vmem:[%s4 + $0x3c] sm:$0xf]
  %v463 = vld [vmem:[%s5] sm:$0x1]
  %v465 = vlaneseq
  %v466 = vshrl.u32 %v465, 7
  %v467 = vsub.s32 0, %v466
  %v468 = vrot.slane %v463, %v467
  %v478 = vunpack.c.l.b16 %v439
  %v479 = vunpack.c.l.b16 %v440
  %v480 = vunpack.c.l.b16 %v441
  %v481 = vunpack.c.l.b16 %v442
  %v482 = vunpack.c.l.b16 %v443
  %v483 = vunpack.c.l.b16 %v444
  %v484 = vunpack.c.l.b16 %v445
  %v485 = vunpack.c.l.b16 %v446
  %vm486 = vcmask 1041409
  %v487 = vsel %vm486, %v479, %v478
  %vm488 = vcmask 1042434
  %v489 = vsel %vm488, %v480, %v487
  %vm490 = vcmask 1043459
  %v491 = vsel %vm490, %v481, %v489
  %vm492 = vcmask 1044484
  %v493 = vsel %vm492, %v482, %v491
  %vm494 = vcmask 1045509
  %v495 = vsel %vm494, %v483, %v493
  %vm496 = vcmask 1046534
  %v497 = vsel %vm496, %v484, %v495
  %vm498 = vcmask 1047559
  %v499 = vsel %vm498, %v485, %v497
  %v500 = vpack.c.b16 %v499, %v499
  %v518 = vunpack.c.l.b16 %v447
  %v519 = vunpack.c.l.b16 %v448
  %v520 = vunpack.c.l.b16 %v449
  %v521 = vunpack.c.l.b16 %v450
  %v522 = vunpack.c.l.b16 %v451
  %v523 = vunpack.c.l.b16 %v452
  %v524 = vunpack.c.l.b16 %v453
  %v525 = vunpack.c.l.b16 %v454
  %v526 = vunpack.c.l.b16 %v455
  %v527 = vunpack.c.l.b16 %v456
  %v528 = vunpack.c.l.b16 %v457
  %v529 = vunpack.c.l.b16 %v458
  %v530 = vunpack.c.l.b16 %v459
  %v531 = vunpack.c.l.b16 %v460
  %v532 = vunpack.c.l.b16 %v461
  %v533 = vunpack.c.l.b16 %v462
  %v534 = vpack.c.b16 %v519, %v518
  %v535 = vpack.c.b16 %v521, %v520
  %v536 = vpack.c.b16 %v523, %v522
  %v537 = vpack.c.b16 %v525, %v524
  %v538 = vpack.c.b16 %v527, %v526
  %v539 = vpack.c.b16 %v529, %v528
  %v540 = vpack.c.b16 %v531, %v530
  %v541 = vpack.c.b16 %v533, %v532
  %550 = vmatprep.subr.bf16.mxu0 0
  %551 = vmatpush1.bf16.msra.mxu0 %v534
  %552 = vmatprep.subr.bf16.mxu0 0
  %553 = vmatpush1.bf16.msra.mxu0 %v535
  %554 = vmatprep.subr.bf16.mxu0 0
  %555 = vmatpush1.bf16.msra.mxu0 %v536
  %556 = vmatprep.subr.bf16.mxu0 0
  %557 = vmatpush1.bf16.msra.mxu0 %v537
  %558 = vmatprep.subr.bf16.mxu0 0
  %559 = vmatpush1.bf16.msra.mxu0 %v538
  %560 = vmatprep.subr.bf16.mxu0 0
  %561 = vmatpush1.bf16.msra.mxu0 %v539
  %562 = vmatprep.subr.bf16.mxu0 0
  %563 = vmatpush1.bf16.msra.mxu0 %v540
  %564 = vmatprep.subr.bf16.mxu0 0
  %565 = vmatpush1.bf16.msra.mxu0 %v541
  %566 = vmatprep.subr.bf16.mxu0 0
  %567 = vmatpush1.bf16.msra.mxu0 0
  %568 = vmatprep.subr.bf16.mxu0 0
  %569 = vmatpush1.bf16.msra.mxu0 0
  %570 = vmatprep.subr.bf16.mxu0 0
  %571 = vmatpush1.bf16.msra.mxu0 0
  %572 = vmatprep.subr.bf16.mxu0 0
  %573 = vmatpush1.bf16.msra.mxu0 0
  %574 = vmatprep.subr.bf16.mxu0 0
  %575 = vmatpush1.bf16.msra.mxu0 0
  %576 = vmatprep.subr.bf16.mxu0 0
  %577 = vmatpush1.bf16.msra.mxu0 0
  %578 = vmatprep.subr.bf16.mxu0 0
  %579 = vmatpush1.bf16.msra.mxu0 0
  %580 = vmatprep.subr.bf16.mxu0 0
  %581 = vmatpush1.bf16.msra.mxu0 0
  %582 = vmatprep.mubr.bf16.mxu0 0
  %583 = vmatmul.mubr.bf16.gmra.mrb[0].mxu0 %v500
  %v584 = vpop.f32.mrb[0].mxu0
  %v585 = vadd.f32 %v468, %v584
  %v586 = vpop.f32.mrb[0].mxu0
  %v587 = vpop.f32.mrb[0].mxu0
  %v588 = vpop.f32.mrb[0].mxu0
  %589 = vdwg.mxu0
  %590 = vst [vmem:[%s6] sm:$0xff] %v585
  // Predicated region
  $region26: #{forward.1} parent=0 // pred_check
    _
  $region27: #{forward.1} parent=0 // pred_check_branch
    %592 = sbr.rel (0) target = $region29
  $region28: #{forward.1} parent=0 // pred_region
    _
  $region29: #{forward.1} parent=0 // pred_fallthru
    _
  // Predicated region
  $region30: #{forward.1} parent=0 // pred_check
    _
  $region31: #{forward.1} parent=0 // pred_check_branch
    %594 = sbr.rel (0) target = $region33
  $region32: #{forward.1} parent=0 // pred_region
    _
  $region33: #{forward.1} parent=0 // pred_fallthru
    _

</llo_original>
